<compile_context>
chip_gen: v7x
topology: tpu7x:2x2x1
jax: 0.10.0
libtpu: 0.0.40
codegen_flags: <defaults>
</compile_context>

<pallas_src>
from functools import partial
import math

import jax
import jax.numpy as jnp
from jax.experimental import pallas as pl
from jax.experimental.pallas import tpu as pltpu


def _round_up(a, b):
    return -(-a // b) * b


def _input_layer_kernel(x_ref, w_ref, b_ref, o_ref, *, t, pad, k_taps, f_in, cd):
    # x_ref : (R, F_in)  R = bb*T rows of the flattened (B*T, F_in) input (whole series only)
    # w_ref : (CD, Fp)   fused im2col weight (zero rows past K*F_in, zero cols past F_out)
    # b_ref : (1, Fp)    lane-dense f32 bias
    # o_ref : (R, Fp)    lane-dense output tile
    x = x_ref[...]
    r = x.shape[0]
    # Time position of each row inside its length-`t` series (tiles start on series
    # boundaries). (R,1) column -> jnp.where broadcasts it across lanes: O(R) int work.
    t_in = jax.lax.broadcasted_iota(jnp.int32, (r, 1), 0) % t

    def tap(k):
        # Output row reads input row (row - shift); rows whose source lies outside the
        # series are zeroed, reproducing ConstantPad1d's zero padding (incl. wraparound).
        shift = pad - k
        if shift == 0:
            return x
        xk = pltpu.roll(x, shift % r, axis=0)                 # XLU rotate, off the VALU/store path
        valid = jnp.logical_and(t_in >= shift, t_in < t + shift)
        return jnp.where(valid, xk, 0.0)

    if f_in % 128 == 0:
        # Lane-aligned taps: accumulate K MXU dots directly, no im2col assembly round-trip.
        acc = jnp.zeros((r, o_ref.shape[-1]), jnp.float32)
        for k in range(k_taps):
            acc = acc + jnp.dot(tap(k).astype(w_ref.dtype),
                                w_ref[k * f_in:(k + 1) * f_in, :],
                                preferred_element_type=jnp.float32)
    else:
        # Assemble the lane-dense im2col operand in registers (single concatenation; the
        # CD - K*F_in pad lanes are explicit zeros) and run ONE fused MXU matmul.
        pieces = [tap(k) for k in range(k_taps)]
        if cd > k_taps * f_in:
            pieces.append(jnp.zeros((r, cd - k_taps * f_in), x.dtype))
        im = jnp.concatenate(pieces, axis=-1).astype(w_ref.dtype)
        acc = jnp.dot(im, w_ref[...], preferred_element_type=jnp.float32)

    acc = acc + b_ref[...]                                     # f32 bias add
    o_ref[...] = jnp.maximum(acc, 0.0).astype(o_ref.dtype)     # ReLU


def input_layer_forward(x, weight, bias, kernel_size=7, *,
                        rows_per_block=1024, compute_dtype=jnp.bfloat16):
    """x: (B, T, F); weight: (F_out, F_in, K) torch-Conv1d layout; bias: (F_out,)."""
    B, T, F = x.shape
    K = kernel_size
    F_out, F_in, Kw = weight.shape
    assert Kw == K and F_in == F, (weight.shape, x.shape, K)
    pad = (K - 1) // 2
    t_out = T + 2 * pad - K + 1            # == T for odd K (module default K=7)

    LANE, SUB = 128, 8
    Fp = _round_up(F_out, LANE)            # lane-dense output channels
    CD = _round_up(K * F_in, LANE)         # padded im2col contraction dim

    # Fused im2col weight (CD, Fp): row k*F_in + ci <-> tap k, in-channel ci.
    # MXU operands in `compute_dtype` (bf16 default), f32 accumulation in-kernel.
    w_fused = jnp.transpose(weight, (2, 1, 0)).reshape(K * F_in, F_out)
    w_fused = jnp.pad(w_fused, ((0, CD - K * F_in), (0, Fp - F_out))).astype(compute_dtype)
    b2 = jnp.pad(bias.reshape(1, F_out).astype(jnp.float32), ((0, 0), (0, Fp - F_out)))

    # ---- tile-size selection (bb whole time-series per grid step) --------------------
    in_b = x.dtype.itemsize
    cd_b = jnp.dtype(compute_dtype).itemsize
    # Per-row live bytes: double-buffered input/output tiles + im2col operand + f32 acc.
    per_row = 2 * F * in_b + 2 * Fp * x.dtype.itemsize + CD * cd_b + Fp * 4
    fixed = 2 * CD * Fp * cd_b + 2 * Fp * 4 + (1 << 20)  # resident weight/bias (2x-buf) + slack
    budget = 48 << 20                      # ~75% of v7x's 64 MiB VMEM; small vs v5e/v6e 128 MiB
    row_limit = min(rows_per_block, max(SUB, (budget - fixed) // per_row))

    g = SUB // math.gcd(T, SUB)            # bb granularity so (bb*T) % 8 == 0, no fallback
    bb = max(g, (row_limit // T) // g * g)           # VMEM cap on rows per step
    bb = min(bb, _round_up(B, g))                    # never pad the batch past one granule
    # Deepen the grid (>= 8 steps => >= 4 per v7x TensorCore, lets the BlockSpec pipeline
    # overlap DMA with compute) while each step keeps >= 256 rows.
    while bb > g and -(-B // bb) < 8 and max(g, bb // 2 // g * g) * T >= 256:
        bb = max(g, bb // 2 // g * g)
    B_pad = _round_up(B, bb)
    R = bb * T
    grid = (B_pad // bb,)

    vmem_limit = int(min(56 << 20, max(32 << 20, fixed + per_row * R + (4 << 20))))

    x2 = x.reshape(B * T, F)               # free reshape; kernel works on flattened rows
    if B_pad != B:                         # pad whole series so R stays (8,.)-aligned
        x2 = jnp.pad(x2, ((0, (B_pad - B) * T), (0, 0)))

    kernel = partial(_input_layer_kernel, t=T, pad=pad, k_taps=K, f_in=F_in, cd=CD)

    out = pl.pallas_call(
        kernel,
        out_shape=jax.ShapeDtypeStruct((B_pad * T, Fp), x.dtype),
        grid_spec=pltpu.PrefetchScalarGridSpec(
            num_scalar_prefetch=0,
            grid=grid,
            in_specs=[
                pl.BlockSpec((R, F), lambda i: (i, 0)),     # row tile of flattened input
                # TODO(synk): pin weight/bias to a single VMEM buffer (pl.Buffered(1)) once
                # verified on the target jax version; a constant index_map may still
                # allocate a second (unused) buffer.
                pl.BlockSpec((CD, Fp), lambda i: (0, 0)),   # fused weight, stays resident
                pl.BlockSpec((1, Fp), lambda i: (0, 0)),    # bias, stays resident
            ],
            out_specs=pl.BlockSpec((R, Fp), lambda i: (i, 0)),
        ),
        compiler_params=pltpu.CompilerParams(
            dimension_semantics=("parallel",),
            vmem_limit_bytes=vmem_limit,
        ),
    )(x2, w_fused, b2)

    # NOTE: when F_out << 128, production consumers should take the lane-padded
    # (B, T, Fp) layout directly; this slice is an extra full-tensor HBM pass.
    return out.reshape(B_pad, T, Fp)[:B, :t_out, :F_out]


def _reference_forward(x, weight, bias, kernel_size=7):
    """Pure-jnp reference matching torch semantics (pad -> conv1d -> relu)."""
    B, T, F = x.shape
    K = kernel_size
    pad = (K - 1) // 2
    t_out = T + 2 * pad - K + 1
    xp = jnp.pad(x, ((0, 0), (pad, pad), (0, 0)))
    out = jnp.broadcast_to(bias[None, None, :], (B, t_out, F)).astype(jnp.float32)
    for k in range(K):
        out = out + jnp.einsum(
            "btc,oc->bto", xp[:, k:k + t_out, :], weight[:, :, k],
            preferred_element_type=jnp.float32,
        )
    return jnp.maximum(out, 0.0).astype(x.dtype)


if __name__ == "__main__":
    B, T, F, K = 2, 16, 8, 7   # batch, window_size, n_features, kernel_size

    key = jax.random.PRNGKey(0)
    kx, kw, kb = jax.random.split(key, 3)
    x = jax.random.normal(kx, (B, T, F), dtype=jnp.float32)
    # Deterministic synthetic Conv1d parameters (torch layout: (out_ch, in_ch, K)).
    weight = (jax.random.normal(kw, (F, F, K), dtype=jnp.float32)
              * (1.0 / jnp.sqrt(F * K)))
    bias = jax.random.normal(kb, (F,), dtype=jnp.float32) * 0.1

    ref = _reference_forward(x, weight, bias, kernel_size=K)

    # 1) f32 MXU operands: exactness check against the pure-jnp reference.
    out_f32 = jax.block_until_ready(
        input_layer_forward(x, weight, bias, kernel_size=K, compute_dtype=jnp.float32))
    assert out_f32.shape == (B, T, F), out_f32.shape
    assert jnp.allclose(out_f32, ref, atol=1e-5, rtol=1e-5), "f32 path mismatch vs reference"

    # 2) Default path (bf16 MXU operands, f32 accumulate): tight check against a reference
    #    with identically-rounded operands, loose check against the full-f32 reference.
    out = jax.block_until_ready(input_layer_forward(x, weight, bias, kernel_size=K))
    ref_bf16 = _reference_forward(
        x.astype(jnp.bfloat16).astype(jnp.float32),
        weight.astype(jnp.bfloat16).astype(jnp.float32),
        bias, kernel_size=K)
    assert out.shape == (B, T, F), out.shape
    assert jnp.allclose(out, ref_bf16, atol=1e-4, rtol=1e-4), "bf16 path mismatch vs bf16 reference"
    assert jnp.allclose(out, ref, atol=5e-2, rtol=5e-2), "bf16 path too far from f32 reference"

    print("KERNEL_OK")
</pallas_src>

<mosaic_0001>
module attributes {stable_mosaic.version = 11 : i64} {
  func.func @_input_layer_kernel(%arg0: i32, %arg1: memref<32x8xf32, #tpu.memory_space<vmem>>, %arg2: memref<128x128xf32, #tpu.memory_space<vmem>>, %arg3: memref<1x128xf32, #tpu.memory_space<vmem>>, %arg4: memref<32x128xf32, #tpu.memory_space<vmem>>) attributes {dimension_semantics = [#tpu.dimension_semantics<parallel>], iteration_bounds = array<i64: 1>, scalar_prefetch = 0 : i64, scratch_operands = 0 : i64, tpu.core_type = #tpu.core_type<tc>, window_params = [{transform_indices = @transform_0, window_bounds = array<i64: 32, 8>}, {pipeline_mode = #tpu.pipeline_mode<synchronous>, transform_indices = @transform_1, window_bounds = array<i64: 128, 128>}, {pipeline_mode = #tpu.pipeline_mode<synchronous>, transform_indices = @transform_2, window_bounds = array<i64: 1, 128>}, {transform_indices = @transform_3, window_bounds = array<i64: 32, 128>}]} {
    %c0 = arith.constant 0 : index
    %c0_0 = arith.constant 0 : index
    %0 = vector.load %arg1[%c0, %c0_0] : memref<32x8xf32, #tpu.memory_space<vmem>>, vector<32x8xf32>
    %1 = tpu.iota {dimensions = array<i32: 0>} : vector<32x1xi32>
    %c16_i32 = arith.constant 16 : i32
    %c0_i32 = arith.constant 0 : i32
    %2 = arith.cmpi eq, %c16_i32, %c0_i32 : i32
    %c1_i32 = arith.constant 1 : i32
    %3 = arith.select %2, %c1_i32, %c16_i32 : i32
    %4 = vector.broadcast %3 : i32 to vector<32x1xi32>
    %5 = arith.remsi %1, %4 : vector<32x1xi32>
    %c0_i32_1 = arith.constant 0 : i32
    %6 = vector.broadcast %c0_i32_1 : i32 to vector<32x1xi32>
    %7 = arith.cmpi ne, %5, %6 : vector<32x1xi32>
    %c0_i32_2 = arith.constant 0 : i32
    %8 = vector.broadcast %c0_i32_2 : i32 to vector<32x1xi32>
    %9 = arith.cmpi slt, %5, %8 : vector<32x1xi32>
    %c0_i32_3 = arith.constant 0 : i32
    %10 = arith.cmpi slt, %3, %c0_i32_3 : i32
    %11 = vector.broadcast %10 : i1 to vector<32x1xi1>
    %12 = vector.broadcast %11 : vector<32x1xi1> to vector<32x1xi1>
    %13 = arith.xori %9, %12 : vector<32x1xi1>
    %14 = arith.andi %13, %7 : vector<32x1xi1>
    %15 = vector.broadcast %3 : i32 to vector<32x1xi32>
    %16 = arith.addi %5, %15 : vector<32x1xi32>
    %17 = arith.select %14, %16, %5 : vector<32x1xi1>, vector<32x1xi32>
    %c3_i32 = arith.constant 3 : i32
    %18 = tpu.dynamic_rotate %0 by %c3_i32 dim 0 : vector<32x8xf32>, i32 -> vector<32x8xf32>
    %c3_i32_4 = arith.constant 3 : i32
    %19 = vector.broadcast %c3_i32_4 : i32 to vector<32x1xi32>
    %20 = arith.cmpi sge, %17, %19 : vector<32x1xi32>
    %c19_i32 = arith.constant 19 : i32
    %21 = vector.broadcast %c19_i32 : i32 to vector<32x1xi32>
    %22 = arith.cmpi slt, %17, %21 : vector<32x1xi32>
    %23 = arith.andi %20, %22 : vector<32x1xi1>
    %cst = arith.constant 0.000000e+00 : f32
    %24 = vector.shape_cast %23 : vector<32x1xi1> to vector<32x1xi1>
    %25 = vector.broadcast %24 : vector<32x1xi1> to vector<32x8xi1>
    %26 = vector.broadcast %cst : f32 to vector<32x8xf32>
    %27 = arith.select %25, %18, %26 : vector<32x8xi1>, vector<32x8xf32>
    %c2_i32 = arith.constant 2 : i32
    %28 = tpu.dynamic_rotate %0 by %c2_i32 dim 0 : vector<32x8xf32>, i32 -> vector<32x8xf32>
    %c2_i32_5 = arith.constant 2 : i32
    %29 = vector.broadcast %c2_i32_5 : i32 to vector<32x1xi32>
    %30 = arith.cmpi sge, %17, %29 : vector<32x1xi32>
    %c18_i32 = arith.constant 18 : i32
    %31 = vector.broadcast %c18_i32 : i32 to vector<32x1xi32>
    %32 = arith.cmpi slt, %17, %31 : vector<32x1xi32>
    %33 = arith.andi %30, %32 : vector<32x1xi1>
    %cst_6 = arith.constant 0.000000e+00 : f32
    %34 = vector.shape_cast %33 : vector<32x1xi1> to vector<32x1xi1>
    %35 = vector.broadcast %34 : vector<32x1xi1> to vector<32x8xi1>
    %36 = vector.broadcast %cst_6 : f32 to vector<32x8xf32>
    %37 = arith.select %35, %28, %36 : vector<32x8xi1>, vector<32x8xf32>
    %c1_i32_7 = arith.constant 1 : i32
    %38 = tpu.dynamic_rotate %0 by %c1_i32_7 dim 0 : vector<32x8xf32>, i32 -> vector<32x8xf32>
    %c1_i32_8 = arith.constant 1 : i32
    %39 = vector.broadcast %c1_i32_8 : i32 to vector<32x1xi32>
    %40 = arith.cmpi sge, %17, %39 : vector<32x1xi32>
    %c17_i32 = arith.constant 17 : i32
    %41 = vector.broadcast %c17_i32 : i32 to vector<32x1xi32>
    %42 = arith.cmpi slt, %17, %41 : vector<32x1xi32>
    %43 = arith.andi %40, %42 : vector<32x1xi1>
    %cst_9 = arith.constant 0.000000e+00 : f32
    %44 = vector.shape_cast %43 : vector<32x1xi1> to vector<32x1xi1>
    %45 = vector.broadcast %44 : vector<32x1xi1> to vector<32x8xi1>
    %46 = vector.broadcast %cst_9 : f32 to vector<32x8xf32>
    %47 = arith.select %45, %38, %46 : vector<32x8xi1>, vector<32x8xf32>
    %c31_i32 = arith.constant 31 : i32
    %48 = tpu.dynamic_rotate %0 by %c31_i32 dim 0 : vector<32x8xf32>, i32 -> vector<32x8xf32>
    %c-1_i32 = arith.constant -1 : i32
    %49 = vector.broadcast %c-1_i32 : i32 to vector<32x1xi32>
    %50 = arith.cmpi sge, %17, %49 : vector<32x1xi32>
    %c15_i32 = arith.constant 15 : i32
    %51 = vector.broadcast %c15_i32 : i32 to vector<32x1xi32>
    %52 = arith.cmpi slt, %17, %51 : vector<32x1xi32>
    %53 = arith.andi %50, %52 : vector<32x1xi1>
    %cst_10 = arith.constant 0.000000e+00 : f32
    %54 = vector.shape_cast %53 : vector<32x1xi1> to vector<32x1xi1>
    %55 = vector.broadcast %54 : vector<32x1xi1> to vector<32x8xi1>
    %56 = vector.broadcast %cst_10 : f32 to vector<32x8xf32>
    %57 = arith.select %55, %48, %56 : vector<32x8xi1>, vector<32x8xf32>
    %c30_i32 = arith.constant 30 : i32
    %58 = tpu.dynamic_rotate %0 by %c30_i32 dim 0 : vector<32x8xf32>, i32 -> vector<32x8xf32>
    %c-2_i32 = arith.constant -2 : i32
    %59 = vector.broadcast %c-2_i32 : i32 to vector<32x1xi32>
    %60 = arith.cmpi sge, %17, %59 : vector<32x1xi32>
    %c14_i32 = arith.constant 14 : i32
    %61 = vector.broadcast %c14_i32 : i32 to vector<32x1xi32>
    %62 = arith.cmpi slt, %17, %61 : vector<32x1xi32>
    %63 = arith.andi %60, %62 : vector<32x1xi1>
    %cst_11 = arith.constant 0.000000e+00 : f32
    %64 = vector.shape_cast %63 : vector<32x1xi1> to vector<32x1xi1>
    %65 = vector.broadcast %64 : vector<32x1xi1> to vector<32x8xi1>
    %66 = vector.broadcast %cst_11 : f32 to vector<32x8xf32>
    %67 = arith.select %65, %58, %66 : vector<32x8xi1>, vector<32x8xf32>
    %c29_i32 = arith.constant 29 : i32
    %68 = tpu.dynamic_rotate %0 by %c29_i32 dim 0 : vector<32x8xf32>, i32 -> vector<32x8xf32>
    %c-3_i32 = arith.constant -3 : i32
    %69 = vector.broadcast %c-3_i32 : i32 to vector<32x1xi32>
    %70 = arith.cmpi sge, %17, %69 : vector<32x1xi32>
    %c13_i32 = arith.constant 13 : i32
    %71 = vector.broadcast %c13_i32 : i32 to vector<32x1xi32>
    %72 = arith.cmpi slt, %17, %71 : vector<32x1xi32>
    %73 = arith.andi %70, %72 : vector<32x1xi1>
    %cst_12 = arith.constant 0.000000e+00 : f32
    %74 = vector.shape_cast %73 : vector<32x1xi1> to vector<32x1xi1>
    %75 = vector.broadcast %74 : vector<32x1xi1> to vector<32x8xi1>
    %76 = vector.broadcast %cst_12 : f32 to vector<32x8xf32>
    %77 = arith.select %75, %68, %76 : vector<32x8xi1>, vector<32x8xf32>
    %cst_13 = arith.constant 0.000000e+00 : f32
    %78 = vector.broadcast %cst_13 : f32 to vector<32x72xf32>
    %79 = tpu.concatenate %27, %37, %47, %0, %57, %67, %77, %78 in 1 : vector<32x8xf32>, vector<32x8xf32>, vector<32x8xf32>, vector<32x8xf32>, vector<32x8xf32>, vector<32x8xf32>, vector<32x8xf32>, vector<32x72xf32> -> vector<32x128xf32>
    %c0_14 = arith.constant 0 : index
    %c0_15 = arith.constant 0 : index
    %80 = vector.load %arg2[%c0_14, %c0_15] : memref<128x128xf32, #tpu.memory_space<vmem>>, vector<128x128xf32>
    %cst_16 = arith.constant dense<0.000000e+00> : vector<32x128xf32>
    %81 = tpu.matmul %79, %80, %cst_16 {dimension_numbers = #tpu.dot_dimension_numbers<[1], [0], [0], [1], [0, 0, 1, 1], [], []>} : vector<32x128xf32>, vector<128x128xf32>, vector<32x128xf32> -> vector<32x128xf32>
    %c0_17 = arith.constant 0 : index
    %c0_18 = arith.constant 0 : index
    %82 = vector.load %arg3[%c0_17, %c0_18] : memref<1x128xf32, #tpu.memory_space<vmem>>, vector<1x128xf32>
    %83 = vector.broadcast %82 : vector<1x128xf32> to vector<32x128xf32>
    %84 = arith.addf %81, %83 : vector<32x128xf32>
    %cst_19 = arith.constant 0.000000e+00 : f32
    %85 = vector.broadcast %cst_19 : f32 to vector<32x128xf32>
    %86 = arith.maximumf %84, %85 : vector<32x128xf32>
    %c0_20 = arith.constant 0 : index
    %c0_21 = arith.constant 0 : index
    %87 = vector.load %arg4[%c0_20, %c0_21] : memref<32x128xf32, #tpu.memory_space<vmem>>, vector<32x128xf32>
    tpu.vector_store %arg4[%c0_20, %c0_21], %86 {strides = array<i32>} : memref<32x128xf32, #tpu.memory_space<vmem>>, vector<32x128xf32>,
    return
  }
  func.func @transform_0(%arg0: i32) -> (i32, i32) {
    %c0_i32 = arith.constant 0 : i32
    %c0_i32_0 = arith.constant 0 : i32
    return %arg0, %c0_i32 : i32, i32
  }
  func.func @transform_1(%arg0: i32) -> (i32, i32) {
    %c0_i32 = arith.constant 0 : i32
    %c0_i32_0 = arith.constant 0 : i32
    %c0_i32_1 = arith.constant 0 : i32
    return %c0_i32, %c0_i32_0 : i32, i32
  }
  func.func @transform_2(%arg0: i32) -> (i32, i32) {
    %c0_i32 = arith.constant 0 : i32
    %c0_i32_0 = arith.constant 0 : i32
    %c0_i32_1 = arith.constant 0 : i32
    return %c0_i32, %c0_i32_0 : i32, i32
  }
  func.func @transform_3(%arg0: i32) -> (i32, i32) {
    %c0_i32 = arith.constant 0 : i32
    %c0_i32_0 = arith.constant 0 : i32
    return %arg0, %c0_i32 : i32, i32
  }
}

</mosaic_0001>

<llo_original>
// kernel: tpu_custom_call.1
$region0: #{tpu_custom_call.1}
  #allocation0 [shape = 'u32[]', space=smem, size = 0x4, offset = 0x4, fixed_abs, tag = 'smem constant byte address 0x4 - core index']
  #allocation1 [shape = 'u32[144,128]{1,0:T(1,128)}', space=vmem, size = 0x12000, scoped, tag = 'internal scratch']
  %s0 = inlined_call_operand.vmem [shape: f32[32,8], index: 0, kind: input, shape index: {}]
  %s1 = inlined_call_operand.hbm [shape: f32[128,128], index: 1, kind: input, shape index: {}]
  %s2 = inlined_call_operand.vmem [shape: f32[1,128], index: 2, kind: input, shape index: {}]
  %s3 = inlined_call_operand.hbm [shape: f32[32,128], index: 3, kind: output, shape index: {}]
  %s4 = sld [smem:[#allocation0]]
  $region26: #{tpu_custom_call.1} parent=0
    _
  %s6 = ssub.s32 1, %s4
  %s7 = scalar_select 0, %s6, %s4
  $region1: #{tpu_custom_call.1} parent=0
    #allocation2 [shape = 'u8[65536]{0}', space=vmem, size = 0x10000, scoped, tag = 'input window, operand 1, single buffered']
    #allocation3 [shape = 's32[1]{0}', space=sflag, size = 0x4, scoped, tag = 'scoped memory for tpu_custom_call.1']
    #allocation4 [shape = 's32[1]{0}', space=sflag, size = 0x4, scoped, tag = 'scoped memory for tpu_custom_call.1']
    #allocation5 [shape = 'u8[16384]{0}', space=vmem, size = 0x4000, scoped, tag = 'output window, operand 0, single buffered']
    %8 = vsyncpa [#allocation3], 0
    %9 = vsyncpa [#allocation4], 0
    // Predicated region
    $region2: #{tpu_custom_call.1} parent=1 // pred_check
      _
    $region3: #{tpu_custom_call.1} parent=1 // pred_check_branch
      %11 = sbr.rel (0) target = $region5
    $region4: #{tpu_custom_call.1} parent=1 // pred_region
      _
    $region5: #{tpu_custom_call.1} parent=1 // pred_fallthru
      _
    // Predicated region
    $region6: #{tpu_custom_call.1} parent=1 // pred_check
      _
    $region7: #{tpu_custom_call.1} parent=1 // pred_check_branch
      %13 = sbr.rel (0) target = $region9
    $region8: #{tpu_custom_call.1} parent=1 // pred_region
      %s15 = ssub.s32 2048, 2048
      %16 = vsyncadd [#allocation3], %s15
      %s17 = sshll.u32 [#allocation2], 4
      %s18 = int_to_ptr.vmem [resolvable:$true] %s17
      %23 = dma.hbm_to_vmem [thread:$0]  %s1, 2048, %s18, [#allocation3], 128, 128, 8
    $region9: #{tpu_custom_call.1} parent=1 // pred_fallthru
      _
    // Predicated region
    $region10: #{tpu_custom_call.1} parent=1 // pred_check
      _
    $region11: #{tpu_custom_call.1} parent=1 // pred_check_branch
      %25 = sbr.rel (0) target = $region13
    $region12: #{tpu_custom_call.1} parent=1 // pred_region
      _
    $region13: #{tpu_custom_call.1} parent=1 // pred_fallthru
      _
    // Predicated region
    $region14: #{tpu_custom_call.1} parent=1 // pred_check
      _
    $region15: #{tpu_custom_call.1} parent=1 // pred_check_branch
      %27 = sbr.rel (0) target = $region17
    $region16: #{tpu_custom_call.1} parent=1 // pred_region
      %28 = dma.done [#allocation3], 2048
    $region17: #{tpu_custom_call.1} parent=1 // pred_fallthru
      _
    %v29 = vld [vmem:[%s0] sm:$0xff]
    %v30 = vld [vmem:[%s0 + $0x8] sm:$0xff]
    %v31 = vld [vmem:[%s0 + $0x10] sm:$0xff]
    %v32 = vld [vmem:[%s0 + $0x18] sm:$0xff]
    %v33 = vlaneseq
    %v34 = vshrl.u32 %v33, 7
    %v35 = vadd.s32 %v34, 8
    %v36 = vadd.s32 %v34, 16
    %v37 = vadd.s32 %v34, 24
    %vm38 = vcmp.lt.s32.totalorder %v34, 0
    %v39 = vsub.s32 0, %v34
    %v40 = vsel %vm38, %v39, %v34
    %v41 = vshrl.u32 %v40, 4
    %v42 = vand.u32 %v40, 15
    %v43 = vsub.s32 0, %v42
    %v44 = vsel %vm38, %v43, %v42
    %vm45 = vcmp.lt.s32.totalorder %v35, 0
    %v46 = vsub.s32 0, %v35
    %v47 = vsel %vm45, %v46, %v35
    %v48 = vshrl.u32 %v47, 4
    %v49 = vand.u32 %v47, 15
    %v50 = vsub.s32 0, %v49
    %v51 = vsel %vm45, %v50, %v49
    %vm52 = vcmp.lt.s32.totalorder %v36, 0
    %v53 = vsub.s32 0, %v36
    %v54 = vsel %vm52, %v53, %v36
    %v55 = vshrl.u32 %v54, 4
    %v56 = vand.u32 %v54, 15
    %v57 = vsub.s32 0, %v56
    %v58 = vsel %vm52, %v57, %v56
    %vm59 = vcmp.lt.s32.totalorder %v37, 0
    %v60 = vsub.s32 0, %v37
    %v61 = vsel %vm59, %v60, %v37
    %v62 = vshrl.u32 %v61, 4
    %v63 = vand.u32 %v61, 15
    %v64 = vsub.s32 0, %v63
    %v65 = vsel %vm59, %v64, %v63
    %vm66 = vcmp.ne.s32.totalorder %v44, 0
    %vm67 = vcmp.ne.s32.totalorder %v51, 0
    %vm68 = vcmp.ne.s32.totalorder %v58, 0
    %vm69 = vcmp.ne.s32.totalorder %v65, 0
    %vm70 = vcmp.lt.s32.totalorder %v44, 0
    %vm71 = vcmp.lt.s32.totalorder %v51, 0
    %vm72 = vcmp.lt.s32.totalorder %v58, 0
    %vm73 = vcmp.lt.s32.totalorder %v65, 0
    %vm74 = vmand %vm70, %vm66
    %vm75 = vmand %vm71, %vm67
    %vm76 = vmand %vm72, %vm68
    %vm77 = vmand %vm73, %vm69
    %v78 = vadd.s32 %v44, 16
    %v79 = vadd.s32 %v51, 16
    %v80 = vadd.s32 %v58, 16
    %v81 = vadd.s32 %v65, 16
    %v82 = vsel %vm74, %v78, %v44
    %v83 = vsel %vm75, %v79, %v51
    %v84 = vsel %vm76, %v80, %v58
    %v85 = vsel %vm77, %v81, %v65
    %v86 = vrot.slane %v29, 5
    %v87 = vrot.slane %v30, 5
    %v88 = vrot.slane %v31, 5
    %v89 = vrot.slane %v32, 5
    %vm90 = vcmp.lt.s32.totalorder %v34, 3
    %v91 = vsel %vm90, %v88, %v89
    %v92 = vsel %vm90, %v87, %v88
    %v93 = vsel %vm90, %v86, %v87
    %v94 = vsel %vm90, %v89, %v86
    %vm95 = vcmp.ge.s32.totalorder %v82, 3
    %vm96 = vcmp.ge.s32.totalorder %v83, 3
    %vm97 = vcmp.ge.s32.totalorder %v84, 3
    %vm98 = vcmp.ge.s32.totalorder %v85, 3
    %vm99 = vcmp.lt.s32.totalorder %v82, 19
    %vm100 = vcmp.lt.s32.totalorder %v83, 19
    %vm101 = vcmp.lt.s32.totalorder %v84, 19
    %vm102 = vcmp.lt.s32.totalorder %v85, 19
    %vm103 = vmand %vm95, %vm99
    %vm104 = vmand %vm96, %vm100
    %vm105 = vmand %vm97, %vm101
    %vm106 = vmand %vm98, %vm102
    %v107 = vsel %vm103, 1, 0
    %v108 = vsel %vm104, 1, 0
    %v109 = vsel %vm105, 1, 0
    %v110 = vsel %vm106, 1, 0
    %vm111 = vcmp.eq.s32.totalorder %v107, 1
    %vm112 = vcmp.eq.s32.totalorder %v108, 1
    %vm113 = vcmp.eq.s32.totalorder %v109, 1
    %vm114 = vcmp.eq.s32.totalorder %v110, 1
    %v115 = vsel %vm111, %v94, 0.0
    %v116 = vsel %vm112, %v93, 0.0
    %v117 = vsel %vm113, %v92, 0.0
    %v118 = vsel %vm114, %v91, 0.0
    %v119 = vrot.slane %v29, 6
    %v120 = vrot.slane %v30, 6
    %v121 = vrot.slane %v31, 6
    %v122 = vrot.slane %v32, 6
    %vm123 = vcmp.lt.s32.totalorder %v34, 2
    %v124 = vsel %vm123, %v121, %v122
    %v125 = vsel %vm123, %v120, %v121
    %v126 = vsel %vm123, %v119, %v120
    %v127 = vsel %vm123, %v122, %v119
    %vm128 = vcmp.ge.s32.totalorder %v82, 2
    %vm129 = vcmp.ge.s32.totalorder %v83, 2
    %vm130 = vcmp.ge.s32.totalorder %v84, 2
    %vm131 = vcmp.ge.s32.totalorder %v85, 2
    %vm132 = vcmp.lt.s32.totalorder %v82, 18
    %vm133 = vcmp.lt.s32.totalorder %v83, 18
    %vm134 = vcmp.lt.s32.totalorder %v84, 18
    %vm135 = vcmp.lt.s32.totalorder %v85, 18
    %vm136 = vmand %vm128, %vm132
    %vm137 = vmand %vm129, %vm133
    %vm138 = vmand %vm130, %vm134
    %vm139 = vmand %vm131, %vm135
    %v140 = vsel %vm136, 1, 0
    %v141 = vsel %vm137, 1, 0
    %v142 = vsel %vm138, 1, 0
    %v143 = vsel %vm139, 1, 0
    %vm144 = vcmp.eq.s32.totalorder %v140, 1
    %vm145 = vcmp.eq.s32.totalorder %v141, 1
    %vm146 = vcmp.eq.s32.totalorder %v142, 1
    %vm147 = vcmp.eq.s32.totalorder %v143, 1
    %v148 = vsel %vm144, %v127, 0.0
    %v149 = vsel %vm145, %v126, 0.0
    %v150 = vsel %vm146, %v125, 0.0
    %v151 = vsel %vm147, %v124, 0.0
    %v152 = vrot.slane %v29, 7
    %v153 = vrot.slane %v30, 7
    %v154 = vrot.slane %v31, 7
    %v155 = vrot.slane %v32, 7
    %vm156 = vcmp.lt.s32.totalorder %v34, 1
    %v157 = vsel %vm156, %v154, %v155
    %v158 = vsel %vm156, %v153, %v154
    %v159 = vsel %vm156, %v152, %v153
    %v160 = vsel %vm156, %v155, %v152
    %vm161 = vcmp.ge.s32.totalorder %v82, 1
    %vm162 = vcmp.ge.s32.totalorder %v83, 1
    %vm163 = vcmp.ge.s32.totalorder %v84, 1
    %vm164 = vcmp.ge.s32.totalorder %v85, 1
    %vm165 = vcmp.lt.s32.totalorder %v82, 17
    %vm166 = vcmp.lt.s32.totalorder %v83, 17
    %vm167 = vcmp.lt.s32.totalorder %v84, 17
    %vm168 = vcmp.lt.s32.totalorder %v85, 17
    %vm169 = vmand %vm161, %vm165
    %vm170 = vmand %vm162, %vm166
    %vm171 = vmand %vm163, %vm167
    %vm172 = vmand %vm164, %vm168
    %v173 = vsel %vm169, 1, 0
    %v174 = vsel %vm170, 1, 0
    %v175 = vsel %vm171, 1, 0
    %v176 = vsel %vm172, 1, 0
    %vm177 = vcmp.eq.s32.totalorder %v173, 1
    %vm178 = vcmp.eq.s32.totalorder %v174, 1
    %vm179 = vcmp.eq.s32.totalorder %v175, 1
    %vm180 = vcmp.eq.s32.totalorder %v176, 1
    %v181 = vsel %vm177, %v160, 0.0
    %v182 = vsel %vm178, %v159, 0.0
    %v183 = vsel %vm179, %v158, 0.0
    %v184 = vsel %vm180, %v157, 0.0
    %v185 = vrot.slane %v29, 1
    %v186 = vrot.slane %v30, 1
    %v187 = vrot.slane %v31, 1
    %v188 = vrot.slane %v32, 1
    %vm189 = vcmp.lt.s32.totalorder %v34, 7
    %v190 = vsel %vm189, %v187, %v188
    %v191 = vsel %vm189, %v186, %v187
    %v192 = vsel %vm189, %v185, %v186
    %v193 = vsel %vm189, %v188, %v185
    %vm194 = vcmp.ge.s32.totalorder %v82, 4294967295
    %vm195 = vcmp.ge.s32.totalorder %v83, 4294967295
    %vm196 = vcmp.ge.s32.totalorder %v84, 4294967295
    %vm197 = vcmp.ge.s32.totalorder %v85, 4294967295
    %vm198 = vcmp.lt.s32.totalorder %v82, 15
    %vm199 = vcmp.lt.s32.totalorder %v83, 15
    %vm200 = vcmp.lt.s32.totalorder %v84, 15
    %vm201 = vcmp.lt.s32.totalorder %v85, 15
    %vm202 = vmand %vm194, %vm198
    %vm203 = vmand %vm195, %vm199
    %vm204 = vmand %vm196, %vm200
    %vm205 = vmand %vm197, %vm201
    %v206 = vsel %vm202, 1, 0
    %v207 = vsel %vm203, 1, 0
    %v208 = vsel %vm204, 1, 0
    %v209 = vsel %vm205, 1, 0
    %vm210 = vcmp.eq.s32.totalorder %v206, 1
    %vm211 = vcmp.eq.s32.totalorder %v207, 1
    %vm212 = vcmp.eq.s32.totalorder %v208, 1
    %vm213 = vcmp.eq.s32.totalorder %v209, 1
    %v214 = vsel %vm210, %v192, 0.0
    %v215 = vsel %vm211, %v191, 0.0
    %v216 = vsel %vm212, %v190, 0.0
    %v217 = vsel %vm213, %v193, 0.0
    %v218 = vrot.slane %v29, 2
    %v219 = vrot.slane %v30, 2
    %v220 = vrot.slane %v31, 2
    %v221 = vrot.slane %v32, 2
    %vm222 = vcmp.lt.s32.totalorder %v34, 6
    %v223 = vsel %vm222, %v220, %v221
    %v224 = vsel %vm222, %v219, %v220
    %v225 = vsel %vm222, %v218, %v219
    %v226 = vsel %vm222, %v221, %v218
    %vm227 = vcmp.ge.s32.totalorder %v82, 4294967294
    %vm228 = vcmp.ge.s32.totalorder %v83, 4294967294
    %vm229 = vcmp.ge.s32.totalorder %v84, 4294967294
    %vm230 = vcmp.ge.s32.totalorder %v85, 4294967294
    %vm231 = vcmp.lt.s32.totalorder %v82, 14
    %vm232 = vcmp.lt.s32.totalorder %v83, 14
    %vm233 = vcmp.lt.s32.totalorder %v84, 14
    %vm234 = vcmp.lt.s32.totalorder %v85, 14
    %vm235 = vmand %vm227, %vm231
    %vm236 = vmand %vm228, %vm232
    %vm237 = vmand %vm229, %vm233
    %vm238 = vmand %vm230, %vm234
    %v239 = vsel %vm235, 1, 0
    %v240 = vsel %vm236, 1, 0
    %v241 = vsel %vm237, 1, 0
    %v242 = vsel %vm238, 1, 0
    %vm243 = vcmp.eq.s32.totalorder %v239, 1
    %vm244 = vcmp.eq.s32.totalorder %v240, 1
    %vm245 = vcmp.eq.s32.totalorder %v241, 1
    %vm246 = vcmp.eq.s32.totalorder %v242, 1
    %v247 = vsel %vm243, %v225, 0.0
    %v248 = vsel %vm244, %v224, 0.0
    %v249 = vsel %vm245, %v223, 0.0
    %v250 = vsel %vm246, %v226, 0.0
    %v251 = vrot.slane %v29, 3
    %v252 = vrot.slane %v30, 3
    %v253 = vrot.slane %v31, 3
    %v254 = vrot.slane %v32, 3
    %vm255 = vcmp.lt.s32.totalorder %v34, 5
    %v256 = vsel %vm255, %v253, %v254
    %v257 = vsel %vm255, %v252, %v253
    %v258 = vsel %vm255, %v251, %v252
    %v259 = vsel %vm255, %v254, %v251
    %vm260 = vcmp.ge.s32.totalorder %v82, 4294967293
    %vm261 = vcmp.ge.s32.totalorder %v83, 4294967293
    %vm262 = vcmp.ge.s32.totalorder %v84, 4294967293
    %vm263 = vcmp.ge.s32.totalorder %v85, 4294967293
    %vm264 = vcmp.lt.s32.totalorder %v82, 13
    %vm265 = vcmp.lt.s32.totalorder %v83, 13
    %vm266 = vcmp.lt.s32.totalorder %v84, 13
    %vm267 = vcmp.lt.s32.totalorder %v85, 13
    %vm268 = vmand %vm260, %vm264
    %vm269 = vmand %vm261, %vm265
    %vm270 = vmand %vm262, %vm266
    %vm271 = vmand %vm263, %vm267
    %v272 = vsel %vm268, 1, 0
    %v273 = vsel %vm269, 1, 0
    %v274 = vsel %vm270, 1, 0
    %v275 = vsel %vm271, 1, 0
    %vm276 = vcmp.eq.s32.totalorder %v272, 1
    %vm277 = vcmp.eq.s32.totalorder %v273, 1
    %vm278 = vcmp.eq.s32.totalorder %v274, 1
    %vm279 = vcmp.eq.s32.totalorder %v275, 1
    %v280 = vsel %vm276, %v258, 0.0
    %v281 = vsel %vm277, %v257, 0.0
    %v282 = vsel %vm278, %v256, 0.0
    %v283 = vsel %vm279, %v259, 0.0
    %288 = vrot.lane.b32.xlu0 %v148, 8
    %v289 = vpop.permute.xlu0 %288
    %290 = vrot.lane.b32.xlu0 %v149, 8
    %v291 = vpop.permute.xlu0 %290
    %292 = vrot.lane.b32.xlu0 %v150, 8
    %v293 = vpop.permute.xlu0 %292
    %294 = vrot.lane.b32.xlu0 %v151, 8
    %v295 = vpop.permute.xlu0 %294
    %304 = vrot.lane.b32.xlu0 %v181, 16
    %v305 = vpop.permute.xlu0 %304
    %306 = vrot.lane.b32.xlu0 %v182, 16
    %v307 = vpop.permute.xlu0 %306
    %308 = vrot.lane.b32.xlu0 %v183, 16
    %v309 = vpop.permute.xlu0 %308
    %310 = vrot.lane.b32.xlu0 %v184, 16
    %v311 = vpop.permute.xlu0 %310
    %320 = vrot.lane.b32.xlu0 %v29, 24
    %v321 = vpop.permute.xlu0 %320
    %322 = vrot.lane.b32.xlu0 %v30, 24
    %v323 = vpop.permute.xlu0 %322
    %324 = vrot.lane.b32.xlu0 %v31, 24
    %v325 = vpop.permute.xlu0 %324
    %326 = vrot.lane.b32.xlu0 %v32, 24
    %v327 = vpop.permute.xlu0 %326
    %336 = vrot.lane.b32.xlu0 %v214, 32
    %v337 = vpop.permute.xlu0 %336
    %338 = vrot.lane.b32.xlu0 %v215, 32
    %v339 = vpop.permute.xlu0 %338
    %340 = vrot.lane.b32.xlu0 %v216, 32
    %v341 = vpop.permute.xlu0 %340
    %342 = vrot.lane.b32.xlu0 %v217, 32
    %v343 = vpop.permute.xlu0 %342
    %352 = vrot.lane.b32.xlu0 %v247, 40
    %v353 = vpop.permute.xlu0 %352
    %354 = vrot.lane.b32.xlu0 %v248, 40
    %v355 = vpop.permute.xlu0 %354
    %356 = vrot.lane.b32.xlu0 %v249, 40
    %v357 = vpop.permute.xlu0 %356
    %358 = vrot.lane.b32.xlu0 %v250, 40
    %v359 = vpop.permute.xlu0 %358
    %368 = vrot.lane.b32.xlu0 %v280, 48
    %v369 = vpop.permute.xlu0 %368
    %370 = vrot.lane.b32.xlu0 %v281, 48
    %v371 = vpop.permute.xlu0 %370
    %372 = vrot.lane.b32.xlu0 %v282, 48
    %v373 = vpop.permute.xlu0 %372
    %374 = vrot.lane.b32.xlu0 %v283, 48
    %v375 = vpop.permute.xlu0 %374
    %vm380 = vcmask 64512
    %v381 = vsel %vm380, %v115, %v289
    %v382 = vsel %vm380, %v116, %v291
    %v383 = vsel %vm380, %v117, %v293
    %v384 = vsel %vm380, %v118, %v295
    %vm385 = vcmask 130048
    %v386 = vsel %vm385, %v381, %v305
    %v387 = vsel %vm385, %v382, %v307
    %v388 = vsel %vm385, %v383, %v309
    %v389 = vsel %vm385, %v384, %v311
    %vm390 = vcmask 195584
    %v391 = vsel %vm390, %v386, %v321
    %v392 = vsel %vm390, %v387, %v323
    %v393 = vsel %vm390, %v388, %v325
    %v394 = vsel %vm390, %v389, %v327
    %vm395 = vcmask 261120
    %v396 = vsel %vm395, %v391, %v337
    %v397 = vsel %vm395, %v392, %v339
    %v398 = vsel %vm395, %v393, %v341
    %v399 = vsel %vm395, %v394, %v343
    %vm400 = vcmask 326656
    %v401 = vsel %vm400, %v396, %v353
    %v402 = vsel %vm400, %v397, %v355
    %v403 = vsel %vm400, %v398, %v357
    %v404 = vsel %vm400, %v399, %v359
    %vm405 = vcmask 392192
    %v406 = vsel %vm405, %v401, %v369
    %v407 = vsel %vm405, %v402, %v371
    %v408 = vsel %vm405, %v403, %v373
    %v409 = vsel %vm405, %v404, %v375
    %vm410 = vcmask 457728
    %v411 = vsel %vm410, %v406, 0.0
    %v412 = vsel %vm410, %v407, 0.0
    %v413 = vsel %vm410, %v408, 0.0
    %v414 = vsel %vm410, %v409, 0.0
    %v415 = vld [vmem:[#allocation2] sm:$0xff]
    %v416 = vld [vmem:[#allocation2 + $0x8] sm:$0xff]
    %v417 = vld [vmem:[#allocation2 + $0x10] sm:$0xff]
    %v418 = vld [vmem:[#allocation2 + $0x18] sm:$0xff]
    %v419 = vld [vmem:[#allocation2 + $0x20] sm:$0xff]
    %v420 = vld [vmem:[#allocation2 + $0x28] sm:$0xff]
    %v421 = vld [vmem:[#allocation2 + $0x30] sm:$0xff]
    %v422 = vld [vmem:[#allocation2 + $0x38] sm:$0xff]
    %v423 = vld [vmem:[#allocation2 + $0x40] sm:$0xff]
    %v424 = vld [vmem:[#allocation2 + $0x48] sm:$0xff]
    %v425 = vld [vmem:[#allocation2 + $0x50] sm:$0xff]
    %v426 = vld [vmem:[#allocation2 + $0x58] sm:$0xff]
    %v427 = vld [vmem:[#allocation2 + $0x60] sm:$0xff]
    %v428 = vld [vmem:[#allocation2 + $0x68] sm:$0xff]
    %v429 = vld [vmem:[#allocation2 + $0x70] sm:$0xff]
    %v430 = vld [vmem:[#allocation2 + $0x78] sm:$0xff]
    %v431 = vld [vmem:[%s2] sm:$0x1]
    %v433 = vlaneseq
    %v434 = vshrl.u32 %v433, 7
    %v435 = vsub.s32 0, %v434
    %v436 = vrot.slane %v431, %v435
    %438 = vmatprep.subr.mxu0 0.0
    %439 = vmatpush1.msra.mxu0 %v415
    %440 = vmatprep.subr.mxu0 0.0
    %441 = vmatpush1.msra.mxu0 %v416
    %442 = vmatprep.subr.mxu0 0.0
    %443 = vmatpush1.msra.mxu0 %v417
    %444 = vmatprep.subr.mxu0 0.0
    %445 = vmatpush1.msra.mxu0 %v418
    %446 = vmatprep.subr.mxu0 0.0
    %447 = vmatpush1.msra.mxu0 %v419
    %448 = vmatprep.subr.mxu0 0.0
    %449 = vmatpush1.msra.mxu0 %v420
    %450 = vmatprep.subr.mxu0 0.0
    %451 = vmatpush1.msra.mxu0 %v421
    %452 = vmatprep.subr.mxu0 0.0
    %453 = vmatpush1.msra.mxu0 %v422
    %454 = vmatprep.subr.mxu0 0.0
    %455 = vmatpush1.msra.mxu0 %v423
    %456 = vmatprep.subr.mxu0 0.0
    %457 = vmatpush1.msra.mxu0 %v424
    %458 = vmatprep.subr.mxu0 0.0
    %459 = vmatpush1.msra.mxu0 %v425
    %460 = vmatprep.subr.mxu0 0.0
    %461 = vmatpush1.msra.mxu0 %v426
    %462 = vmatprep.subr.mxu0 0.0
    %463 = vmatpush1.msra.mxu0 %v427
    %464 = vmatprep.subr.mxu0 0.0
    %465 = vmatpush1.msra.mxu0 %v428
    %466 = vmatprep.subr.mxu0 0.0
    %467 = vmatpush1.msra.mxu0 %v429
    %468 = vmatprep.subr.mxu0 0.0
    %469 = vmatpush1.msra.mxu0 %v430
    %470 = vmatprep.subr.mxu0 0.0
    %471 = vmatpush1.msra.mxu0 0.0
    %472 = vmatprep.subr.mxu0 0.0
    %473 = vmatpush1.msra.mxu0 0.0
    %474 = vmatprep.subr.mxu0 0.0
    %475 = vmatpush1.msra.mxu0 0.0
    %476 = vmatprep.subr.mxu0 0.0
    %477 = vmatpush1.msra.mxu0 0.0
    %478 = vmatprep.subr.mxu0 0.0
    %479 = vmatpush1.msra.mxu0 0.0
    %480 = vmatprep.subr.mxu0 0.0
    %481 = vmatpush1.msra.mxu0 0.0
    %482 = vmatprep.subr.mxu0 0.0
    %483 = vmatpush1.msra.mxu0 0.0
    %484 = vmatprep.subr.mxu0 0.0
    %485 = vmatpush1.msra.mxu0 0.0
    %486 = vmatprep.subr.mxu0 0.0
    %487 = vmatpush1.msra.mxu0 0.0
    %488 = vmatprep.subr.mxu0 0.0
    %489 = vmatpush1.msra.mxu0 0.0
    %490 = vmatprep.subr.mxu0 0.0
    %491 = vmatpush1.msra.mxu0 0.0
    %492 = vmatprep.subr.mxu0 0.0
    %493 = vmatpush1.msra.mxu0 0.0
    %494 = vmatprep.subr.mxu0 0.0
    %495 = vmatpush1.msra.mxu0 0.0
    %496 = vmatprep.subr.mxu0 0.0
    %497 = vmatpush1.msra.mxu0 0.0
    %498 = vmatprep.subr.mxu0 0.0
    %499 = vmatpush1.msra.mxu0 0.0
    %500 = vmatprep.subr.mxu0 0.0
    %501 = vmatpush1.msra.mxu0 0.0
    %502 = vmatprep.mubr.f32.mxu0 0.0
    %503 = vmatmul.mubr.f32.gmra.mrb[0].mxu0 %v411
    %v504 = vpop.f32.mrb[0].mxu0
    %v505 = vadd.f32 %v436, %v504
    %v506 = vpop.f32.mrb[0].mxu0
    %507 = vmatprep.mubr.f32.mxu0 0.0
    %508 = vmatmul.mubr.f32.gmra.mrb[0].mxu0 %v412
    %v509 = vpop.f32.mrb[0].mxu0
    %v510 = vadd.f32 %v436, %v509
    %v511 = vpop.f32.mrb[0].mxu0
    %512 = vmatprep.mubr.f32.mxu0 0.0
    %513 = vmatmul.mubr.f32.gmra.mrb[0].mxu0 %v413
    %v514 = vpop.f32.mrb[0].mxu0
    %v515 = vadd.f32 %v436, %v514
    %v516 = vpop.f32.mrb[0].mxu0
    %517 = vmatprep.mubr.f32.mxu0 0.0
    %518 = vmatmul.mubr.f32.gmra.mrb[0].mxu0 %v414
    %v519 = vpop.f32.mrb[0].mxu0
    %v520 = vadd.f32 %v436, %v519
    %v521 = vpop.f32.mrb[0].mxu0
    %522 = vdwg.mxu0
    %v523 = vmax.f32 %v505, 0.0
    %v524 = vmax.f32 %v510, 0.0
    %v525 = vmax.f32 %v515, 0.0
    %v526 = vmax.f32 %v520, 0.0
    %527 = vst [vmem:[#allocation5] sm:$0xff] %v523
    %528 = vst [vmem:[#allocation5 + $0x8] sm:$0xff] %v524
    %529 = vst [vmem:[#allocation5 + $0x10] sm:$0xff] %v525
    %530 = vst [vmem:[#allocation5 + $0x18] sm:$0xff] %v526
    // Predicated region
    $region18: #{tpu_custom_call.1} parent=1 // pred_check
      _
    $region19: #{tpu_custom_call.1} parent=1 // pred_check_branch
      %532 = sbr.rel (0) target = $region21
    $region20: #{tpu_custom_call.1} parent=1 // pred_region
      %s534 = ssub.s32 512, 512
      %535 = vsyncadd [#allocation4], %s534
      %s536 = sshll.u32 [#allocation5], 4
      %s537 = int_to_ptr.vmem [resolvable:$true] %s536
      %542 = dma.vmem_to_hbm [thread:$0]  %s537, 512, %s3, [#allocation4], 128, 128, 8
    $region21: #{tpu_custom_call.1} parent=1 // pred_fallthru
      _
    // Predicated region
    $region22: #{tpu_custom_call.1} parent=1 // pred_check
      _
    $region23: #{tpu_custom_call.1} parent=1 // pred_check_branch
      %544 = sbr.rel (0) target = $region25
    $region24: #{tpu_custom_call.1} parent=1 // pred_region
      %545 = dma.done [#allocation4], 512
    $region25: #{tpu_custom_call.1} parent=1 // pred_fallthru
      _
    %546 = vsyncpa [#allocation3], 1
    %547 = vsyncpa [#allocation4], 1

</llo_original>
